<compile_context>
chip_gen: v7x
topology: tpu7x:2x2x1
jax: 0.10.0
libtpu: 0.0.40
codegen_flags: <defaults>
</compile_context>

<pallas_src>
import functools

import jax
import jax.numpy as jnp
from jax import lax
from jax.experimental import pallas as pl
from jax.experimental.pallas import tpu as pltpu

# Default upper bound on the batch tile (review: 4096-8192, sweep up to 16384).
_MAX_BATCH_TILE = 8192


def _round_up(n, m):
    return ((n + m - 1) // m) * m


def _mlp_kernel(x_ref, w12_ref, b12_ref, w3_ref, b3_ref, w4t_ref, b4_ref,
                o_ref, *, compute_dtype):
    # x tile: (batch_tile, 63).  Only cast if the producer didn't already hand
    # us the MXU compute dtype (bf16 input avoids this cast entirely).
    x = x_ref[...]
    if x.dtype != compute_dtype:
        x = x.astype(compute_dtype)

    # Fused Linear(63,63)+Linear(63,32) (pre-multiplied in the wrapper), ReLU.
    h = jnp.dot(x, w12_ref[...], preferred_element_type=jnp.float32)
    h = jnp.maximum(h + b12_ref[...], 0.0)                      # (bt, 32) f32

    # Linear(32, 24) + ReLU.
    h = jnp.dot(h.astype(compute_dtype), w3_ref[...],
                preferred_element_type=jnp.float32)
    h = jnp.maximum(h + b3_ref[...], 0.0)                       # (bt, 24) f32

    # Linear(24, 1) + Sigmoid, computed transposed ((1,24) . (bt,24)^T) so the
    # per-tile result (1, bt) is lane-dense -> unmasked vector stores.
    logits_t = lax.dot_general(
        w4t_ref[...], h.astype(compute_dtype),
        dimension_numbers=(((1,), (1,)), ((), ())),
        preferred_element_type=jnp.float32)                     # (1, bt)
    b4 = b4_ref[0, 0]                                           # SMEM scalar
    o_ref[...] = jax.nn.sigmoid(logits_t + b4).astype(o_ref.dtype)


@functools.partial(jax.jit, static_argnames=("batch_tile", "compute_dtype"))
def finger_tracking_forward(x, params, *, batch_tile=None,
                            compute_dtype=jnp.bfloat16):
    """x: (B, 63) float32 or bfloat16. Returns (B, 1) float32 in [0, 1]."""
    (w1, b1), (w2, b2), (w3, b3), (w4, b4) = params
    B, D_in = x.shape
    assert D_in == 63

    # Auto-choose the batch tile: large enough to amortize per-step pipeline
    # overhead, clamped so small batches don't pad up to a huge tile.
    if batch_tile is None:
        batch_tile = min(_MAX_BATCH_TILE, _round_up(B, 128))
    assert batch_tile % 128 == 0, "batch_tile must be a multiple of 128"

    # Algebraic fusion of Linear(63,63) -> Linear(63,32):
    #   (x@W1 + b1)@W2 + b2  ==  x@(W1@W2) + (b1@W2 + b2)
    # (Intentional numerics change vs. running the two layers separately in
    #  bf16; fusion is done in f32 and only then cast to the compute dtype.)
    w12 = jnp.dot(w1, w2, preferred_element_type=jnp.float32)        # (63, 32)
    b12 = jnp.dot(b1, w2, preferred_element_type=jnp.float32) + b2   # (1, 32)

    # Matmul operands in the MXU-native compute dtype; biases stay f32.
    w12c = w12.astype(compute_dtype)
    w3c = w3.astype(compute_dtype)
    w4t = jnp.transpose(w4).astype(compute_dtype)                    # (1, 24)

    # Pad the batch so callers can pass arbitrary B.
    B_pad = _round_up(B, batch_tile)
    if B_pad != B:
        x = jnp.pad(x, ((0, B_pad - B), (0, 0)))
    num_tiles = B_pad // batch_tile

    # Triple-buffer the x input when there are enough grid steps for it to help.
    x_spec_kwargs = {}
    if num_tiles >= 3:
        x_spec_kwargs["pipeline_mode"] = pl.Buffered(3)
    x_spec = pl.BlockSpec((batch_tile, 63), lambda i: (i, 0), **x_spec_kwargs)

    kernel = functools.partial(_mlp_kernel, compute_dtype=compute_dtype)

    out_row = pl.pallas_call(
        kernel,
        out_shape=jax.ShapeDtypeStruct((1, B_pad), jnp.float32),
        grid_spec=pltpu.PrefetchScalarGridSpec(
            num_scalar_prefetch=0,
            grid=(num_tiles,),
            in_specs=[
                x_spec,                                             # x tile
                pl.BlockSpec((63, 32), lambda i: (0, 0)),           # W12
                pl.BlockSpec((1, 32), lambda i: (0, 0)),            # b12
                pl.BlockSpec((32, 24), lambda i: (0, 0)),           # W3
                pl.BlockSpec((1, 24), lambda i: (0, 0)),            # b3
                pl.BlockSpec((1, 24), lambda i: (0, 0)),            # W4^T
                pl.BlockSpec(memory_space=pltpu.MemorySpace.SMEM),  # b4 scalar
            ],
            out_specs=pl.BlockSpec((1, batch_tile), lambda i: (0, i)),
        ),
        compiler_params=pltpu.CompilerParams(
            dimension_semantics=("parallel",)),
    )(x, w12c, b12, w3c, b3, w4t, b4)

    # (1, B_pad) lane-dense row -> (B, 1) column, dropping padded rows.
    return out_row.reshape(B_pad, 1)[:B]


def init_params(key):
    """Deterministic init mimicking PyTorch Linear default (uniform +-1/sqrt(fan_in)).

    Weights are stored as (in_features, out_features); biases as (1, out)."""
    dims = [(63, 63), (63, 32), (32, 24), (24, 1)]
    params = []
    for (fan_in, fan_out) in dims:
        key, kw, kb = jax.random.split(key, 3)
        bound = 1.0 / jnp.sqrt(float(fan_in))
        w = jax.random.uniform(kw, (fan_in, fan_out), jnp.float32, -bound, bound)
        b = jax.random.uniform(kb, (1, fan_out), jnp.float32, -bound, bound)
        params.append((w, b))
    return tuple(params)


def _reference_forward(x, params):
    """Unfused f32 reference, mirroring the PyTorch module exactly."""
    (w1, b1), (w2, b2), (w3, b3), (w4, b4) = params
    h = x @ w1 + b1
    h = h @ w2 + b2
    h = jnp.maximum(h, 0.0)
    h = h @ w3 + b3
    h = jnp.maximum(h, 0.0)
    h = h @ w4 + b4
    return jax.nn.sigmoid(h)


if __name__ == "__main__":
    key = jax.random.PRNGKey(0)
    key, kx = jax.random.split(key)

    B = 16  # small demo batch; auto tile clamps to one 128-row tile
    x = jax.random.normal(kx, (B, 63), jnp.float32)
    params = init_params(key)

    ref = _reference_forward(x, params)

    # f32 compute path with f32 input: numerically tight vs. unfused reference.
    out_f32 = jax.block_until_ready(
        finger_tracking_forward(x, params, compute_dtype=jnp.float32))
    assert out_f32.shape == (B, 1)
    assert jnp.allclose(out_f32, ref, atol=1e-5, rtol=1e-5), "f32 mismatch vs reference"

    # Production path: producer-supplied bf16 input + bf16 MXU operands,
    # f32 accumulation and f32 epilogue.
    x_bf16 = x.astype(jnp.bfloat16)  # stands in for an upstream bf16 producer
    out_bf16 = jax.block_until_ready(finger_tracking_forward(x_bf16, params))
    assert out_bf16.shape == (B, 1)
    assert jnp.allclose(out_bf16, ref, atol=3e-2, rtol=0.0), "bf16 mismatch vs reference"

    # Multi-tile path: exercises batch padding, the (parallel,) grid and the
    # Buffered(3) x pipeline with a small override tile.
    key, kx2 = jax.random.split(key)
    B2 = 300
    x2 = jax.random.normal(kx2, (B2, 63), jnp.float32)
    ref2 = _reference_forward(x2, params)
    out2 = jax.block_until_ready(
        finger_tracking_forward(x2.astype(jnp.bfloat16), params, batch_tile=128))
    assert out2.shape == (B2, 1)
    assert jnp.allclose(out2, ref2, atol=3e-2, rtol=0.0), "multi-tile mismatch vs reference"

    print("KERNEL_OK")
</pallas_src>

<mosaic_0001>
module attributes {stable_mosaic.version = 11 : i64} {
  func.func @_mlp_kernel(%arg0: i32, %arg1: memref<128x63xf32, #tpu.memory_space<vmem>>, %arg2: memref<63x32xf32, #tpu.memory_space<vmem>>, %arg3: memref<1x32xf32, #tpu.memory_space<vmem>>, %arg4: memref<32x24xf32, #tpu.memory_space<vmem>>, %arg5: memref<1x24xf32, #tpu.memory_space<vmem>>, %arg6: memref<1x24xf32, #tpu.memory_space<vmem>>, %arg7: memref<1x1xf32, #tpu.memory_space<smem>>, %arg8: memref<1x128xf32, #tpu.memory_space<vmem>>) attributes {dimension_semantics = [#tpu.dimension_semantics<parallel>], iteration_bounds = array<i64: 1>, scalar_prefetch = 0 : i64, scratch_operands = 0 : i64, tpu.core_type = #tpu.core_type<tc>, window_params = [{transform_indices = @transform_0, window_bounds = array<i64: 128, 63>}, {pipeline_mode = #tpu.pipeline_mode<synchronous>, transform_indices = @transform_1, window_bounds = array<i64: 63, 32>}, {pipeline_mode = #tpu.pipeline_mode<synchronous>, transform_indices = @transform_2, window_bounds = array<i64: 1, 32>}, {pipeline_mode = #tpu.pipeline_mode<synchronous>, transform_indices = @transform_3, window_bounds = array<i64: 32, 24>}, {pipeline_mode = #tpu.pipeline_mode<synchronous>, transform_indices = @transform_4, window_bounds = array<i64: 1, 24>}, {pipeline_mode = #tpu.pipeline_mode<synchronous>, transform_indices = @transform_5, window_bounds = array<i64: 1, 24>}, {transform_indices = @transform_6, window_bounds = array<i64: 1, 1>}, {transform_indices = @transform_7, window_bounds = array<i64: 1, 128>}]} {
    %c0 = arith.constant 0 : index
    %c0_0 = arith.constant 0 : index
    %0 = vector.load %arg1[%c0, %c0_0] : memref<128x63xf32, #tpu.memory_space<vmem>>, vector<128x63xf32>
    %c0_1 = arith.constant 0 : index
    %c0_2 = arith.constant 0 : index
    %1 = vector.load %arg2[%c0_1, %c0_2] : memref<63x32xf32, #tpu.memory_space<vmem>>, vector<63x32xf32>
    %cst = arith.constant dense<0.000000e+00> : vector<128x32xf32>
    %2 = tpu.matmul %0, %1, %cst {dimension_numbers = #tpu.dot_dimension_numbers<[1], [0], [0], [1], [0, 0, 1, 1], [], []>} : vector<128x63xf32>, vector<63x32xf32>, vector<128x32xf32> -> vector<128x32xf32>
    %c0_3 = arith.constant 0 : index
    %c0_4 = arith.constant 0 : index
    %3 = vector.load %arg3[%c0_3, %c0_4] : memref<1x32xf32, #tpu.memory_space<vmem>>, vector<1x32xf32>
    %4 = vector.broadcast %3 : vector<1x32xf32> to vector<128x32xf32>
    %5 = arith.addf %2, %4 : vector<128x32xf32>
    %cst_5 = arith.constant 0.000000e+00 : f32
    %6 = vector.broadcast %cst_5 : f32 to vector<128x32xf32>
    %7 = arith.maximumf %5, %6 : vector<128x32xf32>
    %c0_6 = arith.constant 0 : index
    %c0_7 = arith.constant 0 : index
    %8 = vector.load %arg4[%c0_6, %c0_7] : memref<32x24xf32, #tpu.memory_space<vmem>>, vector<32x24xf32>
    %cst_8 = arith.constant dense<0.000000e+00> : vector<128x24xf32>
    %9 = tpu.matmul %7, %8, %cst_8 {dimension_numbers = #tpu.dot_dimension_numbers<[1], [0], [0], [1], [0, 0, 1, 1], [], []>} : vector<128x32xf32>, vector<32x24xf32>, vector<128x24xf32> -> vector<128x24xf32>
    %c0_9 = arith.constant 0 : index
    %c0_10 = arith.constant 0 : index
    %10 = vector.load %arg5[%c0_9, %c0_10] : memref<1x24xf32, #tpu.memory_space<vmem>>, vector<1x24xf32>
    %11 = vector.broadcast %10 : vector<1x24xf32> to vector<128x24xf32>
    %12 = arith.addf %9, %11 : vector<128x24xf32>
    %cst_11 = arith.constant 0.000000e+00 : f32
    %13 = vector.broadcast %cst_11 : f32 to vector<128x24xf32>
    %14 = arith.maximumf %12, %13 : vector<128x24xf32>
    %c0_12 = arith.constant 0 : index
    %c0_13 = arith.constant 0 : index
    %15 = vector.load %arg6[%c0_12, %c0_13] : memref<1x24xf32, #tpu.memory_space<vmem>>, vector<1x24xf32>
    %cst_14 = arith.constant dense<0.000000e+00> : vector<1x128xf32>
    %16 = tpu.matmul %15, %14, %cst_14 {dimension_numbers = #tpu.dot_dimension_numbers<[1], [1], [0], [0], [0, 0, 1, 0], [], []>} : vector<1x24xf32>, vector<128x24xf32>, vector<1x128xf32> -> vector<1x128xf32>
    %c0_15 = arith.constant 0 : index
    %c0_16 = arith.constant 0 : index
    %17 = memref.load %arg7[%c0_15, %c0_16] : memref<1x1xf32, #tpu.memory_space<smem>>
    %18 = vector.broadcast %17 : f32 to vector<1x128xf32>
    %19 = arith.addf %16, %18 : vector<1x128xf32>
    %20 = arith.negf %19 : vector<1x128xf32>
    %21 = math.exp %20 : vector<1x128xf32>
    %cst_17 = arith.constant 1.000000e+00 : f32
    %22 = vector.broadcast %cst_17 : f32 to vector<1x128xf32>
    %23 = arith.addf %22, %21 : vector<1x128xf32>
    %24 = arith.divf %22, %23 : vector<1x128xf32>
    %c0_18 = arith.constant 0 : index
    %c0_19 = arith.constant 0 : index
    %25 = vector.load %arg8[%c0_18, %c0_19] : memref<1x128xf32, #tpu.memory_space<vmem>>, vector<1x128xf32>
    tpu.vector_store %arg8[%c0_18, %c0_19], %24 {strides = array<i32>} : memref<1x128xf32, #tpu.memory_space<vmem>>, vector<1x128xf32>,
    return
  }
  func.func @transform_0(%arg0: i32) -> (i32, i32) {
    %c0_i32 = arith.constant 0 : i32
    %c0_i32_0 = arith.constant 0 : i32
    return %arg0, %c0_i32 : i32, i32
  }
  func.func @transform_1(%arg0: i32) -> (i32, i32) {
    %c0_i32 = arith.constant 0 : i32
    %c0_i32_0 = arith.constant 0 : i32
    %c0_i32_1 = arith.constant 0 : i32
    return %c0_i32, %c0_i32_0 : i32, i32
  }
  func.func @transform_2(%arg0: i32) -> (i32, i32) {
    %c0_i32 = arith.constant 0 : i32
    %c0_i32_0 = arith.constant 0 : i32
    %c0_i32_1 = arith.constant 0 : i32
    return %c0_i32, %c0_i32_0 : i32, i32
  }
  func.func @transform_3(%arg0: i32) -> (i32, i32) {
    %c0_i32 = arith.constant 0 : i32
    %c0_i32_0 = arith.constant 0 : i32
    %c0_i32_1 = arith.constant 0 : i32
    return %c0_i32, %c0_i32_0 : i32, i32
  }
  func.func @transform_4(%arg0: i32) -> (i32, i32) {
    %c0_i32 = arith.constant 0 : i32
    %c0_i32_0 = arith.constant 0 : i32
    %c0_i32_1 = arith.constant 0 : i32
    return %c0_i32, %c0_i32_0 : i32, i32
  }
  func.func @transform_5(%arg0: i32) -> (i32, i32) {
    %c0_i32 = arith.constant 0 : i32
    %c0_i32_0 = arith.constant 0 : i32
    %c0_i32_1 = arith.constant 0 : i32
    return %c0_i32, %c0_i32_0 : i32, i32
  }
  func.func @transform_6(%arg0: i32) -> (i32, i32) {
    %c0_i32 = arith.constant 0 : i32
    %c0_i32_0 = arith.constant 0 : i32
    %c0_i32_1 = arith.constant 0 : i32
    return %c0_i32, %c0_i32_0 : i32, i32
  }
  func.func @transform_7(%arg0: i32) -> (i32, i32) {
    %c0_i32 = arith.constant 0 : i32
    %c0_i32_0 = arith.constant 0 : i32
    return %c0_i32, %arg0 : i32, i32
  }
}

</mosaic_0001>

<llo_original>
// kernel: finger_tracking_forward.1
$region0: #{finger_tracking_forward.1}
  #allocation0 [shape = 'u32[]', space=smem, size = 0x4, offset = 0x4, fixed_abs, tag = 'smem constant byte address 0x4 - core index']
  #allocation1 [shape = 'u32[144,128]{1,0:T(1,128)}', space=vmem, size = 0x12000, scoped, tag = 'internal scratch']
  #allocation2 [shape = 'f32[1,1]{1,0:T(1,128)S(6)}', space=smem, size = 0x200, scoped, tag = 'scoped memory for finger_tracking_forward.1']
  %s0 = inlined_call_operand.vmem [shape: f32[128,63], index: 0, kind: input, shape index: {}]
  %s1 = inlined_call_operand.vmem [shape: f32[63,32], index: 1, kind: input, shape index: {}]
  %s2 = inlined_call_operand.vmem [shape: f32[1,32], index: 2, kind: input, shape index: {}]
  %s3 = inlined_call_operand.vmem [shape: f32[32,24], index: 3, kind: input, shape index: {}]
  %s4 = inlined_call_operand.vmem [shape: f32[1,24], index: 4, kind: input, shape index: {}]
  %s5 = inlined_call_operand.vmem [shape: f32[1,24], index: 5, kind: input, shape index: {}]
  %s6 = inlined_call_operand.<no memory space> [shape: f32[1,1], index: 6, kind: input, shape index: {}]
  %s7 = inlined_call_operand.vmem [shape: f32[1,128], index: 7, kind: output, shape index: {}]
  %s8 = sld [smem:[#allocation0]]
  $region38: #{finger_tracking_forward.1} parent=0
    _
  %s10 = ssub.s32 1, %s8
  %s11 = scalar_select 0, %s10, %s8
  %12 = sst [smem:[#allocation2]] %s6
  // Predicated region
  $region2: #{finger_tracking_forward.1} parent=0 // pred_check
    _
  $region3: #{finger_tracking_forward.1} parent=0 // pred_check_branch
    %14 = sbr.rel (0) target = $region5
  $region4: #{finger_tracking_forward.1} parent=0 // pred_region
    _
  $region5: #{finger_tracking_forward.1} parent=0 // pred_fallthru
    _
  // Predicated region
  $region6: #{finger_tracking_forward.1} parent=0 // pred_check
    _
  $region7: #{finger_tracking_forward.1} parent=0 // pred_check_branch
    %16 = sbr.rel (0) target = $region9
  $region8: #{finger_tracking_forward.1} parent=0 // pred_region
    _
  $region9: #{finger_tracking_forward.1} parent=0 // pred_fallthru
    _
  // Predicated region
  $region10: #{finger_tracking_forward.1} parent=0 // pred_check
    _
  $region11: #{finger_tracking_forward.1} parent=0 // pred_check_branch
    %18 = sbr.rel (0) target = $region13
  $region12: #{finger_tracking_forward.1} parent=0 // pred_region
    _
  $region13: #{finger_tracking_forward.1} parent=0 // pred_fallthru
    _
  // Predicated region
  $region14: #{finger_tracking_forward.1} parent=0 // pred_check
    _
  $region15: #{finger_tracking_forward.1} parent=0 // pred_check_branch
    %20 = sbr.rel (0) target = $region17
  $region16: #{finger_tracking_forward.1} parent=0 // pred_region
    _
  $region17: #{finger_tracking_forward.1} parent=0 // pred_fallthru
    _
  // Predicated region
  $region18: #{finger_tracking_forward.1} parent=0 // pred_check
    _
  $region19: #{finger_tracking_forward.1} parent=0 // pred_check_branch
    %22 = sbr.rel (0) target = $region21
  $region20: #{finger_tracking_forward.1} parent=0 // pred_region
    _
  $region21: #{finger_tracking_forward.1} parent=0 // pred_fallthru
    _
  // Predicated region
  $region22: #{finger_tracking_forward.1} parent=0 // pred_check
    _
  $region23: #{finger_tracking_forward.1} parent=0 // pred_check_branch
    %24 = sbr.rel (0) target = $region25
  $region24: #{finger_tracking_forward.1} parent=0 // pred_region
    _
  $region25: #{finger_tracking_forward.1} parent=0 // pred_fallthru
    _
  // Predicated region
  $region26: #{finger_tracking_forward.1} parent=0 // pred_check
    _
  $region27: #{finger_tracking_forward.1} parent=0 // pred_check_branch
    %26 = sbr.rel (0) target = $region29
  $region28: #{finger_tracking_forward.1} parent=0 // pred_region
    _
  $region29: #{finger_tracking_forward.1} parent=0 // pred_fallthru
    _
  %v27 = vld [vmem:[%s0] sm:$0xff]
  %v28 = vld [vmem:[%s0 + $0x8] sm:$0xff]
  %v29 = vld [vmem:[%s0 + $0x10] sm:$0xff]
  %v30 = vld [vmem:[%s0 + $0x18] sm:$0xff]
  %v31 = vld [vmem:[%s0 + $0x20] sm:$0xff]
  %v32 = vld [vmem:[%s0 + $0x28] sm:$0xff]
  %v33 = vld [vmem:[%s0 + $0x30] sm:$0xff]
  %v34 = vld [vmem:[%s0 + $0x38] sm:$0xff]
  %v35 = vld [vmem:[%s0 + $0x40] sm:$0xff]
  %v36 = vld [vmem:[%s0 + $0x48] sm:$0xff]
  %v37 = vld [vmem:[%s0 + $0x50] sm:$0xff]
  %v38 = vld [vmem:[%s0 + $0x58] sm:$0xff]
  %v39 = vld [vmem:[%s0 + $0x60] sm:$0xff]
  %v40 = vld [vmem:[%s0 + $0x68] sm:$0xff]
  %v41 = vld [vmem:[%s0 + $0x70] sm:$0xff]
  %v42 = vld [vmem:[%s0 + $0x78] sm:$0xff]
  %v43 = vld [vmem:[%s1] sm:$0xff]
  %v44 = vld [vmem:[%s1 + $0x8] sm:$0xff]
  %v45 = vld [vmem:[%s1 + $0x10] sm:$0xff]
  %v46 = vld [vmem:[%s1 + $0x18] sm:$0xff]
  %v47 = vld [vmem:[%s1 + $0x20] sm:$0xff]
  %v48 = vld [vmem:[%s1 + $0x28] sm:$0xff]
  %v49 = vld [vmem:[%s1 + $0x30] sm:$0xff]
  %v50 = vld [vmem:[%s1 + $0x38] sm:$0x7f]
  %v51 = vld [vmem:[%s2] sm:$0x1]
  %v53 = vlaneseq
  %v54 = vshrl.u32 %v53, 7
  %v55 = vsub.s32 0, %v54
  %v56 = vrot.slane %v51, %v55
  %vm58 = vcmask 515072
  %v60 = vsel %vm58, %v27, 0
  %v63 = vsel %vm58, %v28, 0
  %v66 = vsel %vm58, %v29, 0
  %v69 = vsel %vm58, %v30, 0
  %v72 = vsel %vm58, %v31, 0
  %v75 = vsel %vm58, %v32, 0
  %v78 = vsel %vm58, %v33, 0
  %v81 = vsel %vm58, %v34, 0
  %v84 = vsel %vm58, %v35, 0
  %v87 = vsel %vm58, %v36, 0
  %v90 = vsel %vm58, %v37, 0
  %v93 = vsel %vm58, %v38, 0
  %v96 = vsel %vm58, %v39, 0
  %v99 = vsel %vm58, %v40, 0
  %v102 = vsel %vm58, %v41, 0
  %v105 = vsel %vm58, %v42, 0
  %vm107 = vcmask 1046528
  %v109 = vsel %vm107, %v50, 0
  %111 = vmatprep.subr.mxu0 0.0
  %112 = vmatpush1.msra.mxu0 %v43
  %113 = vmatprep.subr.mxu0 0.0
  %114 = vmatpush1.msra.mxu0 %v44
  %115 = vmatprep.subr.mxu0 0.0
  %116 = vmatpush1.msra.mxu0 %v45
  %117 = vmatprep.subr.mxu0 0.0
  %118 = vmatpush1.msra.mxu0 %v46
  %119 = vmatprep.subr.mxu0 0.0
  %120 = vmatpush1.msra.mxu0 %v47
  %121 = vmatprep.subr.mxu0 0.0
  %122 = vmatpush1.msra.mxu0 %v48
  %123 = vmatprep.subr.mxu0 0.0
  %124 = vmatpush1.msra.mxu0 %v49
  %125 = vmatprep.subr.mxu0 0.0
  %126 = vmatpush1.msra.mxu0 %v109
  %127 = vmatprep.subr.mxu0 0.0
  %128 = vmatpush1.msra.mxu0 0.0
  %129 = vmatprep.subr.mxu0 0.0
  %130 = vmatpush1.msra.mxu0 0.0
  %131 = vmatprep.subr.mxu0 0.0
  %132 = vmatpush1.msra.mxu0 0.0
  %133 = vmatprep.subr.mxu0 0.0
  %134 = vmatpush1.msra.mxu0 0.0
  %135 = vmatprep.subr.mxu0 0.0
  %136 = vmatpush1.msra.mxu0 0.0
  %137 = vmatprep.subr.mxu0 0.0
  %138 = vmatpush1.msra.mxu0 0.0
  %139 = vmatprep.subr.mxu0 0.0
  %140 = vmatpush1.msra.mxu0 0.0
  %141 = vmatprep.subr.mxu0 0.0
  %142 = vmatpush1.msra.mxu0 0.0
  %143 = vmatprep.subr.mxu0 0.0
  %144 = vmatpush1.msra.mxu0 0.0
  %145 = vmatprep.subr.mxu0 0.0
  %146 = vmatpush1.msra.mxu0 0.0
  %147 = vmatprep.subr.mxu0 0.0
  %148 = vmatpush1.msra.mxu0 0.0
  %149 = vmatprep.subr.mxu0 0.0
  %150 = vmatpush1.msra.mxu0 0.0
  %151 = vmatprep.subr.mxu0 0.0
  %152 = vmatpush1.msra.mxu0 0.0
  %153 = vmatprep.subr.mxu0 0.0
  %154 = vmatpush1.msra.mxu0 0.0
  %155 = vmatprep.subr.mxu0 0.0
  %156 = vmatpush1.msra.mxu0 0.0
  %157 = vmatprep.subr.mxu0 0.0
  %158 = vmatpush1.msra.mxu0 0.0
  %159 = vmatprep.subr.mxu0 0.0
  %160 = vmatpush1.msra.mxu0 0.0
  %161 = vmatprep.subr.mxu0 0.0
  %162 = vmatpush1.msra.mxu0 0.0
  %163 = vmatprep.subr.mxu0 0.0
  %164 = vmatpush1.msra.mxu0 0.0
  %165 = vmatprep.subr.mxu0 0.0
  %166 = vmatpush1.msra.mxu0 0.0
  %167 = vmatprep.subr.mxu0 0.0
  %168 = vmatpush1.msra.mxu0 0.0
  %169 = vmatprep.subr.mxu0 0.0
  %170 = vmatpush1.msra.mxu0 0.0
  %171 = vmatprep.subr.mxu0 0.0
  %172 = vmatpush1.msra.mxu0 0.0
  %173 = vmatprep.subr.mxu0 0.0
  %174 = vmatpush1.msra.mxu0 0.0
  %175 = vmatprep.mubr.f32.mxu0 0.0
  %176 = vmatmul.mubr.f32.gmra.mrb[0].mxu0 %v60
  %v177 = vpop.f32.mrb[0].mxu0
  %v178 = vadd.f32 %v56, %v177
  %v179 = vpop.f32.mrb[0].mxu0
  %180 = vmatprep.mubr.f32.mxu0 0.0
  %181 = vmatmul.mubr.f32.gmra.mrb[0].mxu0 %v63
  %v182 = vpop.f32.mrb[0].mxu0
  %v183 = vadd.f32 %v56, %v182
  %v184 = vpop.f32.mrb[0].mxu0
  %185 = vmatprep.mubr.f32.mxu0 0.0
  %186 = vmatmul.mubr.f32.gmra.mrb[0].mxu0 %v66
  %v187 = vpop.f32.mrb[0].mxu0
  %v188 = vadd.f32 %v56, %v187
  %v189 = vpop.f32.mrb[0].mxu0
  %190 = vmatprep.mubr.f32.mxu0 0.0
  %191 = vmatmul.mubr.f32.gmra.mrb[0].mxu0 %v69
  %v192 = vpop.f32.mrb[0].mxu0
  %v193 = vadd.f32 %v56, %v192
  %v194 = vpop.f32.mrb[0].mxu0
  %195 = vmatprep.mubr.f32.mxu0 0.0
  %196 = vmatmul.mubr.f32.gmra.mrb[0].mxu0 %v72
  %v197 = vpop.f32.mrb[0].mxu0
  %v198 = vadd.f32 %v56, %v197
  %v199 = vpop.f32.mrb[0].mxu0
  %200 = vmatprep.mubr.f32.mxu0 0.0
  %201 = vmatmul.mubr.f32.gmra.mrb[0].mxu0 %v75
  %v202 = vpop.f32.mrb[0].mxu0
  %v203 = vadd.f32 %v56, %v202
  %v204 = vpop.f32.mrb[0].mxu0
  %205 = vmatprep.mubr.f32.mxu0 0.0
  %206 = vmatmul.mubr.f32.gmra.mrb[0].mxu0 %v78
  %v207 = vpop.f32.mrb[0].mxu0
  %v208 = vadd.f32 %v56, %v207
  %v209 = vpop.f32.mrb[0].mxu0
  %210 = vmatprep.mubr.f32.mxu0 0.0
  %211 = vmatmul.mubr.f32.gmra.mrb[0].mxu0 %v81
  %v212 = vpop.f32.mrb[0].mxu0
  %v213 = vadd.f32 %v56, %v212
  %v214 = vpop.f32.mrb[0].mxu0
  %215 = vmatprep.mubr.f32.mxu0 0.0
  %216 = vmatmul.mubr.f32.gmra.mrb[0].mxu0 %v84
  %v217 = vpop.f32.mrb[0].mxu0
  %v218 = vadd.f32 %v56, %v217
  %v219 = vpop.f32.mrb[0].mxu0
  %220 = vmatprep.mubr.f32.mxu0 0.0
  %221 = vmatmul.mubr.f32.gmra.mrb[0].mxu0 %v87
  %v222 = vpop.f32.mrb[0].mxu0
  %v223 = vadd.f32 %v56, %v222
  %v224 = vpop.f32.mrb[0].mxu0
  %225 = vmatprep.mubr.f32.mxu0 0.0
  %226 = vmatmul.mubr.f32.gmra.mrb[0].mxu0 %v90
  %v227 = vpop.f32.mrb[0].mxu0
  %v228 = vadd.f32 %v56, %v227
  %v229 = vpop.f32.mrb[0].mxu0
  %230 = vmatprep.mubr.f32.mxu0 0.0
  %231 = vmatmul.mubr.f32.gmra.mrb[0].mxu0 %v93
  %v232 = vpop.f32.mrb[0].mxu0
  %v233 = vadd.f32 %v56, %v232
  %v234 = vpop.f32.mrb[0].mxu0
  %235 = vmatprep.mubr.f32.mxu0 0.0
  %236 = vmatmul.mubr.f32.gmra.mrb[0].mxu0 %v96
  %v237 = vpop.f32.mrb[0].mxu0
  %v238 = vadd.f32 %v56, %v237
  %v239 = vpop.f32.mrb[0].mxu0
  %240 = vmatprep.mubr.f32.mxu0 0.0
  %241 = vmatmul.mubr.f32.gmra.mrb[0].mxu0 %v99
  %v242 = vpop.f32.mrb[0].mxu0
  %v243 = vadd.f32 %v56, %v242
  %v244 = vpop.f32.mrb[0].mxu0
  %245 = vmatprep.mubr.f32.mxu0 0.0
  %246 = vmatmul.mubr.f32.gmra.mrb[0].mxu0 %v102
  %v247 = vpop.f32.mrb[0].mxu0
  %v248 = vadd.f32 %v56, %v247
  %v249 = vpop.f32.mrb[0].mxu0
  %250 = vmatprep.mubr.f32.mxu0 0.0
  %251 = vmatmul.mubr.f32.gmra.mrb[0].mxu0 %v105
  %v252 = vpop.f32.mrb[0].mxu0
  %v253 = vadd.f32 %v56, %v252
  %v254 = vpop.f32.mrb[0].mxu0
  %255 = vdwg.mxu0
  %v256 = vmax.f32 %v178, 0.0
  %v257 = vmax.f32 %v183, 0.0
  %v258 = vmax.f32 %v188, 0.0
  %v259 = vmax.f32 %v193, 0.0
  %v260 = vmax.f32 %v198, 0.0
  %v261 = vmax.f32 %v203, 0.0
  %v262 = vmax.f32 %v208, 0.0
  %v263 = vmax.f32 %v213, 0.0
  %v264 = vmax.f32 %v218, 0.0
  %v265 = vmax.f32 %v223, 0.0
  %v266 = vmax.f32 %v228, 0.0
  %v267 = vmax.f32 %v233, 0.0
  %v268 = vmax.f32 %v238, 0.0
  %v269 = vmax.f32 %v243, 0.0
  %v270 = vmax.f32 %v248, 0.0
  %v271 = vmax.f32 %v253, 0.0
  %v272 = vld [vmem:[%s3] sm:$0xff]
  %v273 = vld [vmem:[%s3 + $0x8] sm:$0xff]
  %v274 = vld [vmem:[%s3 + $0x10] sm:$0xff]
  %v275 = vld [vmem:[%s3 + $0x18] sm:$0xff]
  %v276 = vld [vmem:[%s4] sm:$0x1]
  %v278 = vlaneseq
  %v279 = vshrl.u32 %v278, 7
  %v280 = vsub.s32 0, %v279
  %v281 = vrot.slane %v276, %v280
  %vm283 = vcmask 261120
  %v285 = vsel %vm283, %v256, 0
  %v288 = vsel %vm283, %v257, 0
  %v291 = vsel %vm283, %v258, 0
  %v294 = vsel %vm283, %v259, 0
  %v297 = vsel %vm283, %v260, 0
  %v300 = vsel %vm283, %v261, 0
  %v303 = vsel %vm283, %v262, 0
  %v306 = vsel %vm283, %v263, 0
  %v309 = vsel %vm283, %v264, 0
  %v312 = vsel %vm283, %v265, 0
  %v315 = vsel %vm283, %v266, 0
  %v318 = vsel %vm283, %v267, 0
  %v321 = vsel %vm283, %v268, 0
  %v324 = vsel %vm283, %v269, 0
  %v327 = vsel %vm283, %v270, 0
  %v330 = vsel %vm283, %v271, 0
  %332 = vmatprep.subr.mxu0 0.0
  %333 = vmatpush1.msra.mxu0 %v272
  %334 = vmatprep.subr.mxu0 0.0
  %335 = vmatpush1.msra.mxu0 %v273
  %336 = vmatprep.subr.mxu0 0.0
  %337 = vmatpush1.msra.mxu0 %v274
  %338 = vmatprep.subr.mxu0 0.0
  %339 = vmatpush1.msra.mxu0 %v275
  %340 = vmatprep.subr.mxu0 0.0
  %341 = vmatpush1.msra.mxu0 0.0
  %342 = vmatprep.subr.mxu0 0.0
  %343 = vmatpush1.msra.mxu0 0.0
  %344 = vmatprep.subr.mxu0 0.0
  %345 = vmatpush1.msra.mxu0 0.0
  %346 = vmatprep.subr.mxu0 0.0
  %347 = vmatpush1.msra.mxu0 0.0
  %348 = vmatprep.subr.mxu0 0.0
  %349 = vmatpush1.msra.mxu0 0.0
  %350 = vmatprep.subr.mxu0 0.0
  %351 = vmatpush1.msra.mxu0 0.0
  %352 = vmatprep.subr.mxu0 0.0
  %353 = vmatpush1.msra.mxu0 0.0
  %354 = vmatprep.subr.mxu0 0.0
  %355 = vmatpush1.msra.mxu0 0.0
  %356 = vmatprep.subr.mxu0 0.0
  %357 = vmatpush1.msra.mxu0 0.0
  %358 = vmatprep.subr.mxu0 0.0
  %359 = vmatpush1.msra.mxu0 0.0
  %360 = vmatprep.subr.mxu0 0.0
  %361 = vmatpush1.msra.mxu0 0.0
  %362 = vmatprep.subr.mxu0 0.0
  %363 = vmatpush1.msra.mxu0 0.0
  %364 = vmatprep.subr.mxu0 0.0
  %365 = vmatpush1.msra.mxu0 0.0
  %366 = vmatprep.subr.mxu0 0.0
  %367 = vmatpush1.msra.mxu0 0.0
  %368 = vmatprep.subr.mxu0 0.0
  %369 = vmatpush1.msra.mxu0 0.0
  %370 = vmatprep.subr.mxu0 0.0
  %371 = vmatpush1.msra.mxu0 0.0
  %372 = vmatprep.subr.mxu0 0.0
  %373 = vmatpush1.msra.mxu0 0.0
  %374 = vmatprep.subr.mxu0 0.0
  %375 = vmatpush1.msra.mxu0 0.0
  %376 = vmatprep.subr.mxu0 0.0
  %377 = vmatpush1.msra.mxu0 0.0
  %378 = vmatprep.subr.mxu0 0.0
  %379 = vmatpush1.msra.mxu0 0.0
  %380 = vmatprep.subr.mxu0 0.0
  %381 = vmatpush1.msra.mxu0 0.0
  %382 = vmatprep.subr.mxu0 0.0
  %383 = vmatpush1.msra.mxu0 0.0
  %384 = vmatprep.subr.mxu0 0.0
  %385 = vmatpush1.msra.mxu0 0.0
  %386 = vmatprep.subr.mxu0 0.0
  %387 = vmatpush1.msra.mxu0 0.0
  %388 = vmatprep.subr.mxu0 0.0
  %389 = vmatpush1.msra.mxu0 0.0
  %390 = vmatprep.subr.mxu0 0.0
  %391 = vmatpush1.msra.mxu0 0.0
  %392 = vmatprep.subr.mxu0 0.0
  %393 = vmatpush1.msra.mxu0 0.0
  %394 = vmatprep.subr.mxu0 0.0
  %395 = vmatpush1.msra.mxu0 0.0
  %396 = vmatprep.mubr.f32.mxu0 0.0
  %397 = vmatmul.mubr.f32.gmra.mrb[0].mxu0 %v285
  %v398 = vpop.f32.mrb[0].mxu0
  %v399 = vadd.f32 %v281, %v398
  %v400 = vpop.f32.mrb[0].mxu0
  %401 = vmatprep.mubr.f32.mxu0 0.0
  %402 = vmatmul.mubr.f32.gmra.mrb[0].mxu0 %v288
  %v403 = vpop.f32.mrb[0].mxu0
  %v404 = vadd.f32 %v281, %v403
  %v405 = vpop.f32.mrb[0].mxu0
  %406 = vmatprep.mubr.f32.mxu0 0.0
  %407 = vmatmul.mubr.f32.gmra.mrb[0].mxu0 %v291
  %v408 = vpop.f32.mrb[0].mxu0
  %v409 = vadd.f32 %v281, %v408
  %v410 = vpop.f32.mrb[0].mxu0
  %411 = vmatprep.mubr.f32.mxu0 0.0
  %412 = vmatmul.mubr.f32.gmra.mrb[0].mxu0 %v294
  %v413 = vpop.f32.mrb[0].mxu0
  %v414 = vadd.f32 %v281, %v413
  %v415 = vpop.f32.mrb[0].mxu0
  %416 = vmatprep.mubr.f32.mxu0 0.0
  %417 = vmatmul.mubr.f32.gmra.mrb[0].mxu0 %v297
  %v418 = vpop.f32.mrb[0].mxu0
  %v419 = vadd.f32 %v281, %v418
  %v420 = vpop.f32.mrb[0].mxu0
  %421 = vmatprep.mubr.f32.mxu0 0.0
  %422 = vmatmul.mubr.f32.gmra.mrb[0].mxu0 %v300
  %v423 = vpop.f32.mrb[0].mxu0
  %v424 = vadd.f32 %v281, %v423
  %v425 = vpop.f32.mrb[0].mxu0
  %426 = vmatprep.mubr.f32.mxu0 0.0
  %427 = vmatmul.mubr.f32.gmra.mrb[0].mxu0 %v303
  %v428 = vpop.f32.mrb[0].mxu0
  %v429 = vadd.f32 %v281, %v428
  %v430 = vpop.f32.mrb[0].mxu0
  %431 = vmatprep.mubr.f32.mxu0 0.0
  %432 = vmatmul.mubr.f32.gmra.mrb[0].mxu0 %v306
  %v433 = vpop.f32.mrb[0].mxu0
  %v434 = vadd.f32 %v281, %v433
  %v435 = vpop.f32.mrb[0].mxu0
  %436 = vmatprep.mubr.f32.mxu0 0.0
  %437 = vmatmul.mubr.f32.gmra.mrb[0].mxu0 %v309
  %v438 = vpop.f32.mrb[0].mxu0
  %v439 = vadd.f32 %v281, %v438
  %v440 = vpop.f32.mrb[0].mxu0
  %441 = vmatprep.mubr.f32.mxu0 0.0
  %442 = vmatmul.mubr.f32.gmra.mrb[0].mxu0 %v312
  %v443 = vpop.f32.mrb[0].mxu0
  %v444 = vadd.f32 %v281, %v443
  %v445 = vpop.f32.mrb[0].mxu0
  %446 = vmatprep.mubr.f32.mxu0 0.0
  %447 = vmatmul.mubr.f32.gmra.mrb[0].mxu0 %v315
  %v448 = vpop.f32.mrb[0].mxu0
  %v449 = vadd.f32 %v281, %v448
  %v450 = vpop.f32.mrb[0].mxu0
  %451 = vmatprep.mubr.f32.mxu0 0.0
  %452 = vmatmul.mubr.f32.gmra.mrb[0].mxu0 %v318
  %v453 = vpop.f32.mrb[0].mxu0
  %v454 = vadd.f32 %v281, %v453
  %v455 = vpop.f32.mrb[0].mxu0
  %456 = vmatprep.mubr.f32.mxu0 0.0
  %457 = vmatmul.mubr.f32.gmra.mrb[0].mxu0 %v321
  %v458 = vpop.f32.mrb[0].mxu0
  %v459 = vadd.f32 %v281, %v458
  %v460 = vpop.f32.mrb[0].mxu0
  %461 = vmatprep.mubr.f32.mxu0 0.0
  %462 = vmatmul.mubr.f32.gmra.mrb[0].mxu0 %v324
  %v463 = vpop.f32.mrb[0].mxu0
  %v464 = vadd.f32 %v281, %v463
  %v465 = vpop.f32.mrb[0].mxu0
  %466 = vmatprep.mubr.f32.mxu0 0.0
  %467 = vmatmul.mubr.f32.gmra.mrb[0].mxu0 %v327
  %v468 = vpop.f32.mrb[0].mxu0
  %v469 = vadd.f32 %v281, %v468
  %v470 = vpop.f32.mrb[0].mxu0
  %471 = vmatprep.mubr.f32.mxu0 0.0
  %472 = vmatmul.mubr.f32.gmra.mrb[0].mxu0 %v330
  %v473 = vpop.f32.mrb[0].mxu0
  %v474 = vadd.f32 %v281, %v473
  %v475 = vpop.f32.mrb[0].mxu0
  %476 = vdwg.mxu0
  %v477 = vmax.f32 %v399, 0.0
  %v478 = vmax.f32 %v404, 0.0
  %v479 = vmax.f32 %v409, 0.0
  %v480 = vmax.f32 %v414, 0.0
  %v481 = vmax.f32 %v419, 0.0
  %v482 = vmax.f32 %v424, 0.0
  %v483 = vmax.f32 %v429, 0.0
  %v484 = vmax.f32 %v434, 0.0
  %v485 = vmax.f32 %v439, 0.0
  %v486 = vmax.f32 %v444, 0.0
  %v487 = vmax.f32 %v449, 0.0
  %v488 = vmax.f32 %v454, 0.0
  %v489 = vmax.f32 %v459, 0.0
  %v490 = vmax.f32 %v464, 0.0
  %v491 = vmax.f32 %v469, 0.0
  %v492 = vmax.f32 %v474, 0.0
  %v493 = vld [vmem:[%s5] sm:$0x1]
  %s494 = sld [smem:[#allocation2]]
  %v495 = vstv %s494
  %vm496 = vcmask 195584
  %v498 = vsel %vm496, %v493, 0
  %v501 = vsel %vm496, %v477, 0
  %v504 = vsel %vm496, %v478, 0
  %v507 = vsel %vm496, %v479, 0
  %v510 = vsel %vm496, %v480, 0
  %v513 = vsel %vm496, %v481, 0
  %v516 = vsel %vm496, %v482, 0
  %v519 = vsel %vm496, %v483, 0
  %v522 = vsel %vm496, %v484, 0
  %v525 = vsel %vm496, %v485, 0
  %v528 = vsel %vm496, %v486, 0
  %v531 = vsel %vm496, %v487, 0
  %v534 = vsel %vm496, %v488, 0
  %v537 = vsel %vm496, %v489, 0
  %v540 = vsel %vm496, %v490, 0
  %v543 = vsel %vm496, %v491, 0
  %v546 = vsel %vm496, %v492, 0
  %548 = vmatprep.subr.mxu0 0.0
  %549 = vmatpush1.xpose.msra.mxu0 %v501
  %550 = vmatprep.subr.mxu0 0.0
  %551 = vmatpush1.xpose.msra.mxu0 %v504
  %552 = vmatprep.subr.mxu0 0.0
  %553 = vmatpush1.xpose.msra.mxu0 %v507
  %554 = vmatprep.subr.mxu0 0.0
  %555 = vmatpush1.xpose.msra.mxu0 %v510
  %556 = vmatprep.subr.mxu0 0.0
  %557 = vmatpush1.xpose.msra.mxu0 %v513
  %558 = vmatprep.subr.mxu0 0.0
  %559 = vmatpush1.xpose.msra.mxu0 %v516
  %560 = vmatprep.subr.mxu0 0.0
  %561 = vmatpush1.xpose.msra.mxu0 %v519
  %562 = vmatprep.subr.mxu0 0.0
  %563 = vmatpush1.xpose.msra.mxu0 %v522
  %564 = vmatprep.subr.mxu0 0.0
  %565 = vmatpush1.xpose.msra.mxu0 %v525
  %566 = vmatprep.subr.mxu0 0.0
  %567 = vmatpush1.xpose.msra.mxu0 %v528
  %568 = vmatprep.subr.mxu0 0.0
  %569 = vmatpush1.xpose.msra.mxu0 %v531
  %570 = vmatprep.subr.mxu0 0.0
  %571 = vmatpush1.xpose.msra.mxu0 %v534
  %572 = vmatprep.subr.mxu0 0.0
  %573 = vmatpush1.xpose.msra.mxu0 %v537
  %574 = vmatprep.subr.mxu0 0.0
  %575 = vmatpush1.xpose.msra.mxu0 %v540
  %576 = vmatprep.subr.mxu0 0.0
  %577 = vmatpush1.xpose.msra.mxu0 %v543
  %578 = vmatprep.subr.mxu0 0.0
  %579 = vmatpush1.xpose.msra.mxu0 %v546
  %580 = vmatprep.subr.mxu0 0.0
  %581 = vmatpush1.xpose.msra.mxu0 0.0
  %582 = vmatprep.subr.mxu0 0.0
  %583 = vmatpush1.xpose.msra.mxu0 0.0
  %584 = vmatprep.subr.mxu0 0.0
  %585 = vmatpush1.xpose.msra.mxu0 0.0
  %586 = vmatprep.subr.mxu0 0.0
  %587 = vmatpush1.xpose.msra.mxu0 0.0
  %588 = vmatprep.subr.mxu0 0.0
  %589 = vmatpush1.xpose.msra.mxu0 0.0
  %590 = vmatprep.subr.mxu0 0.0
  %591 = vmatpush1.xpose.msra.mxu0 0.0
  %592 = vmatprep.subr.mxu0 0.0
  %593 = vmatpush1.xpose.msra.mxu0 0.0
  %594 = vmatprep.subr.mxu0 0.0
  %595 = vmatpush1.xpose.msra.mxu0 0.0
  %596 = vmatprep.subr.mxu0 0.0
  %597 = vmatpush1.xpose.msra.mxu0 0.0
  %598 = vmatprep.subr.mxu0 0.0
  %599 = vmatpush1.xpose.msra.mxu0 0.0
  %600 = vmatprep.subr.mxu0 0.0
  %601 = vmatpush1.xpose.msra.mxu0 0.0
  %602 = vmatprep.subr.mxu0 0.0
  %603 = vmatpush1.xpose.msra.mxu0 0.0
  %604 = vmatprep.subr.mxu0 0.0
  %605 = vmatpush1.xpose.msra.mxu0 0.0
  %606 = vmatprep.subr.mxu0 0.0
  %607 = vmatpush1.xpose.msra.mxu0 0.0
  %608 = vmatprep.subr.mxu0 0.0
  %609 = vmatpush1.xpose.msra.mxu0 0.0
  %610 = vmatprep.subr.mxu0 0.0
  %611 = vmatpush1.xpose.msra.mxu0 0.0
  %612 = vmatprep.mubr.f32.mxu0 0.0
  %613 = vmatmul.mubr.f32.gmra.mrb[0].mxu0 %v498
  %v614 = vpop.f32.mrb[0].mxu0
  %v615 = vadd.f32 %v495, %v614
  %v616 = vpop.f32.mrb[0].mxu0
  %617 = vdwg.mxu0
  %v618 = vxor.u32 %v615, 2147483648
  %v619 = vmul.f32 %v618, 1.442695
  %v620 = vpow.pop %v619
  %v621 = vadd.f32 %v620, 1.0
  %v622 = vrcp.pop %v621
  %v623 = vmul.f32 1.0, %v622
  %624 = vst [vmem:[%s7] sm:$0x1] %v623
  // Predicated region
  $region30: #{finger_tracking_forward.1} parent=0 // pred_check
    _
  $region31: #{finger_tracking_forward.1} parent=0 // pred_check_branch
    %626 = sbr.rel (0) target = $region33
  $region32: #{finger_tracking_forward.1} parent=0 // pred_region
    _
  $region33: #{finger_tracking_forward.1} parent=0 // pred_fallthru
    _
  // Predicated region
  $region34: #{finger_tracking_forward.1} parent=0 // pred_check
    _
  $region35: #{finger_tracking_forward.1} parent=0 // pred_check_branch
    %628 = sbr.rel (0) target = $region37
  $region36: #{finger_tracking_forward.1} parent=0 // pred_region
    _
  $region37: #{finger_tracking_forward.1} parent=0 // pred_fallthru
    _

</llo_original>
